<compile_context>
chip_gen: v7x
topology: tpu7x:2x2x1
jax: 0.10.0
libtpu: 0.0.40
codegen_flags: <defaults>
</compile_context>

<pallas_src>
import functools

import jax
import jax.numpy as jnp
from jax import lax
from jax.experimental import pallas as pl
from jax.experimental.pallas import tpu as pltpu


def _round_up(x, m):
    return ((x + m - 1) // m) * m


def _vmem_limit_bytes(needed):
    """Shape-derived VMEM budget, clamped to the current chip's capacity."""
    cap = 64 * 1024 * 1024
    try:
        cap = int(getattr(pltpu.get_tpu_info(), "vmem_capacity_bytes", cap))
    except Exception:
        pass
    return int(min(max(needed + (4 << 20), 32 << 20), (cap * 3) // 4))


# ---------------------------------------------------------------------------
# Kernel 1: bias-free batched projection  out = x @ w  (bf16 MXU, f32 acc).
# Used for the hoisted input-gate projections of ALL timesteps at once.
# ---------------------------------------------------------------------------
def _proj_kernel(x_ref, w_ref, o_ref):
    # x arrives f32 straight from HBM and is cast on the VPU here (no extra
    # bf16 copy of x materialized in HBM by the wrapper).
    o_ref[...] = jnp.dot(
        x_ref[...].astype(jnp.bfloat16), w_ref[...],
        preferred_element_type=jnp.float32).astype(o_ref.dtype)


def _projection(x2d, w_bf16, *, row_tile, out_dtype):
    """(rows, K) @ (K, Nout) with a large row-tiled parallel grid.

    Rows are padded up to a multiple of row_tile; the padded result is
    returned as-is (callers only read the rows they care about)."""
    rows, k = x2d.shape
    nout = w_bf16.shape[1]
    rows_p = _round_up(rows, row_tile)
    if rows_p != rows:
        x2d = jnp.pad(x2d, ((0, rows_p - rows), (0, 0)))
    needed = (2 * row_tile * k * x2d.dtype.itemsize          # x tiles
              + 2 * k * nout * 2                             # weight (dbl-buf)
              + 2 * row_tile * nout * jnp.dtype(out_dtype).itemsize)
    return pl.pallas_call(
        _proj_kernel,
        out_shape=jax.ShapeDtypeStruct((rows_p, nout), out_dtype),
        grid_spec=pltpu.PrefetchScalarGridSpec(
            num_scalar_prefetch=0,
            grid=(rows_p // row_tile,),
            in_specs=[
                pl.BlockSpec((row_tile, k), lambda i: (i, 0)),
                pl.BlockSpec((k, nout), lambda i: (0, 0)),
            ],
            out_specs=pl.BlockSpec((row_tile, nout), lambda i: (i, 0)),
        ),
        compiler_params=pltpu.CompilerParams(
            dimension_semantics=("parallel",),
            vmem_limit_bytes=_vmem_limit_bytes(needed)),
    )(x2d, w_bf16)


# ---------------------------------------------------------------------------
# Kernel 2: sequential GRU recurrence + fused output projection.
# Consumes precomputed per-step gate inputs gin = [x@Wz^T | x@Wr^T | x@W^T];
# only the two recurrent matmuls sit on the serial critical path; the output
# projection runs once per chunk on the MXU and y is written directly.
# ---------------------------------------------------------------------------
def _gru_recurrence_kernel(gin_ref, uzr_hbm, u_hbm, wout_hbm, bout_ref,
                           y_ref, hlast_ref,
                           h_state, uzr_vmem, u_vmem, wout_vmem, hbuf, sems,
                           *, tl, hidden, batch, seq_len, padded_len):
    chunk = pl.program_id(0)

    @pl.when(chunk == 0)
    def _():
        # One-time weight DMAs, issued back-to-back and overlapped with the
        # h-state zeroing; single-buffered, resident across the whole grid.
        cp_uzr = pltpu.make_async_copy(uzr_hbm, uzr_vmem, sems.at[0])
        cp_u = pltpu.make_async_copy(u_hbm, u_vmem, sems.at[1])
        cp_w = pltpu.make_async_copy(wout_hbm, wout_vmem, sems.at[2])
        cp_uzr.start()
        cp_u.start()
        cp_w.start()
        h_state[...] = jnp.zeros_like(h_state)
        cp_uzr.wait()
        cp_u.wait()
        cp_w.wait()

    uzr = uzr_vmem[...]          # (H, 2H) bf16 : [Uz^T | Ur^T] (fused z/r)
    u = u_vmem[...]              # (H, H)  bf16 : U^T
    h2 = 2 * hidden

    def step(l, h):
        row = pl.multiple_of(l * batch, batch)
        g = gin_ref[pl.ds(row, batch), :].astype(jnp.float32)     # (N, 3H)
        # Fused z/r gate: one (N,H)x(H,2H) MXU dot instead of two.
        zr = jax.nn.sigmoid(
            g[:, :h2]
            + jnp.dot(h.astype(jnp.bfloat16), uzr,
                      preferred_element_type=jnp.float32))
        z = zr[:, :hidden]
        r = zr[:, hidden:]
        h_cand = jnp.tanh(
            g[:, h2:]
            + jnp.dot((r * h).astype(jnp.bfloat16), u,
                      preferred_element_type=jnp.float32))
        # h = z*h + (1-z)*h_cand   rewritten as   h + (1-z)*(h_cand - h)
        h_new = h + (1.0 - z) * (h_cand - h)
        if padded_len != seq_len:
            # Freeze the state on zero-padded tail timesteps.
            t = chunk * tl + l
            h_new = jnp.where(t < seq_len, h_new, h)
        hbuf[pl.ds(row, batch), :] = h_new.astype(hbuf.dtype)
        return h_new

    h_final = lax.fori_loop(0, tl, step, h_state[...], unroll=True)
    h_state[...] = h_final
    hlast_ref[...] = h_final.astype(hlast_ref.dtype)

    # Fused output projection for the whole chunk: (tl*N, H) @ (H, I) + b.
    # h_all never touches HBM; y is written as one lane/sublane-dense block.
    y_ref[...] = (
        jnp.dot(hbuf[...], wout_vmem[...], preferred_element_type=jnp.float32)
        + bout_ref[...].astype(jnp.float32)
    ).astype(y_ref.dtype)


# ---------------------------------------------------------------------------
# Wrapper
# ---------------------------------------------------------------------------
def gru_forward(x, params, *, tl=8, proj_row_tile=256):
    """x: (L, N, I) f32.  Returns (outputs (L, N, I) f32, h_last (N, H) f32)."""
    L, N, I = x.shape
    H = params["uz"].shape[0]
    Lp = _round_up(L, tl)
    assert (tl * N) % 8 == 0, "pick tl so that tl*N is a multiple of 8"

    # Fused / transposed weights; bf16 for the MXU (f32 accumulation).
    wx = jnp.concatenate(
        [params["wz"].T, params["wr"].T, params["w"].T], axis=1
    ).astype(jnp.bfloat16)                                            # (I, 3H)
    uzr = jnp.concatenate(
        [params["uz"].T, params["ur"].T], axis=1).astype(jnp.bfloat16)  # (H, 2H)
    u_t = params["u"].T.astype(jnp.bfloat16)                          # (H, H)
    wout = params["wout"].T.astype(jnp.bfloat16)                      # (H, I)
    bout = params["bout"].reshape(1, I).astype(jnp.float32)

    x_p = x if Lp == L else jnp.pad(x, ((0, Lp - L), (0, 0), (0, 0)))

    # (1) Input projections for ALL timesteps: one big row-tiled matmul,
    #     large row tile decoupled from the recurrence chunk, bf16 output.
    gin = _projection(x_p.reshape(Lp * N, I), wx,
                      row_tile=proj_row_tile, out_dtype=jnp.bfloat16)

    # (2) Sequential recurrence with fused output projection.
    kernel = functools.partial(_gru_recurrence_kernel, tl=tl, hidden=H,
                               batch=N, seq_len=L, padded_len=Lp)
    rec_needed = (2 * (3 * H * H + H * I)          # resident bf16 weights
                  + 2 * tl * N * 3 * H * 2         # double-buffered gin tiles
                  + 2 * tl * N * I * 4             # double-buffered y tiles
                  + tl * N * H * 2                 # hbuf scratch
                  + 2 * N * H * 4 + 2 * I * 4)     # h_state + h_last + bias
    y2d, h_last = pl.pallas_call(
        kernel,
        out_shape=(jax.ShapeDtypeStruct((Lp * N, I), jnp.float32),
                   jax.ShapeDtypeStruct((N, H), jnp.float32)),
        grid_spec=pltpu.PrefetchScalarGridSpec(
            num_scalar_prefetch=0,
            grid=(Lp // tl,),
            in_specs=[
                pl.BlockSpec((tl * N, 3 * H), lambda i: (i, 0)),  # gin chunk
                pl.BlockSpec(memory_space=pl.ANY),   # [Uz|Ur]^T, copied once
                pl.BlockSpec(memory_space=pl.ANY),   # U^T,       copied once
                pl.BlockSpec(memory_space=pl.ANY),   # Wout^T,    copied once
                pl.BlockSpec((1, I), lambda i: (0, 0)),           # bout
            ],
            out_specs=[
                pl.BlockSpec((tl * N, I), lambda i: (i, 0)),      # y chunk
                pl.BlockSpec((N, H), lambda i: (0, 0)),           # h_last
            ],
            scratch_shapes=[
                pltpu.VMEM((N, H), jnp.float32),        # recurrent state h
                pltpu.VMEM((H, 2 * H), jnp.bfloat16),   # resident [Uz|Ur]^T
                pltpu.VMEM((H, H), jnp.bfloat16),       # resident U^T
                pltpu.VMEM((H, I), jnp.bfloat16),       # resident Wout^T
                pltpu.VMEM((tl * N, H), jnp.bfloat16),  # per-chunk h buffer
                pltpu.SemaphoreType.DMA((3,)),          # weight-load sems
            ],
        ),
        compiler_params=pltpu.CompilerParams(
            dimension_semantics=("arbitrary",),         # time recurrence
            vmem_limit_bytes=_vmem_limit_bytes(rec_needed)),
    )(gin, uzr, u_t, wout, bout)

    y = y2d.reshape(Lp, N, I)[:L]
    return y, h_last


# ---------------------------------------------------------------------------
# Pure-JAX reference (matches the PyTorch forward, f32 throughout)
# ---------------------------------------------------------------------------
def gru_reference(x, params):
    L, N, I = x.shape
    H = params["uz"].shape[0]
    h = jnp.zeros((N, H), jnp.float32)
    ys = []
    for i in range(L):
        xt = x[i]
        z = jax.nn.sigmoid(xt @ params["wz"].T + h @ params["uz"].T)
        r = jax.nn.sigmoid(xt @ params["wr"].T + h @ params["ur"].T)
        h_t = jnp.tanh((r * h) @ params["u"].T + xt @ params["w"].T)
        h = z * h + (1.0 - z) * h_t
        ys.append(h @ params["wout"].T + params["bout"])
    return jnp.stack(ys), h


def init_params(key, input_size, hidden_size):
    ks = jax.random.split(key, 8)
    s = 0.1
    return {
        "wz":   s * jax.random.normal(ks[0], (hidden_size, input_size), jnp.float32),
        "uz":   s * jax.random.normal(ks[1], (hidden_size, hidden_size), jnp.float32),
        "wr":   s * jax.random.normal(ks[2], (hidden_size, input_size), jnp.float32),
        "ur":   s * jax.random.normal(ks[3], (hidden_size, hidden_size), jnp.float32),
        "u":    s * jax.random.normal(ks[4], (hidden_size, hidden_size), jnp.float32),
        "w":    s * jax.random.normal(ks[5], (hidden_size, input_size), jnp.float32),
        "wout": s * jax.random.normal(ks[6], (input_size, hidden_size), jnp.float32),
        "bout": s * jax.random.normal(ks[7], (input_size,), jnp.float32),
    }


if __name__ == "__main__":
    L, N, I, H = 8, 4, 16, 32
    key = jax.random.PRNGKey(0)
    kx, kp = jax.random.split(key)
    x = jax.random.normal(kx, (L, N, I), jnp.float32)
    params = init_params(kp, I, H)

    outputs, h_last = gru_forward(x, params, tl=8)
    outputs = jax.block_until_ready(outputs)
    h_last = jax.block_until_ready(h_last)

    ref_out, ref_h = gru_reference(x, params)
    # bf16 MXU operands + bf16 gin/hbuf intermediates (f32 accumulation and
    # f32 gate math) -> slightly looser tolerance vs the f32 reference.
    assert jnp.allclose(outputs, ref_out, atol=2e-2, rtol=2e-2)
    assert jnp.allclose(h_last, ref_h, atol=2e-2, rtol=2e-2)

    print("KERNEL_OK")
</pallas_src>

<mosaic_0001>
module attributes {stable_mosaic.version = 11 : i64} {
  func.func @_proj_kernel(%arg0: i32, %arg1: memref<256x16xf32, #tpu.memory_space<vmem>>, %arg2: memref<16x96xbf16, #tpu.memory_space<vmem>>, %arg3: memref<256x96xbf16, #tpu.memory_space<vmem>>) attributes {dimension_semantics = [#tpu.dimension_semantics<parallel>], iteration_bounds = array<i64: 1>, scalar_prefetch = 0 : i64, scratch_operands = 0 : i64, tpu.core_type = #tpu.core_type<tc>, window_params = [{transform_indices = @transform_0, window_bounds = array<i64: 256, 16>}, {pipeline_mode = #tpu.pipeline_mode<synchronous>, transform_indices = @transform_1, window_bounds = array<i64: 16, 96>}, {transform_indices = @transform_2, window_bounds = array<i64: 256, 96>}]} {
    %c0 = arith.constant 0 : index
    %c0_0 = arith.constant 0 : index
    %0 = vector.load %arg1[%c0, %c0_0] : memref<256x16xf32, #tpu.memory_space<vmem>>, vector<256x16xf32>
    %1 = arith.truncf %0 : vector<256x16xf32> to vector<256x16xbf16>
    %c0_1 = arith.constant 0 : index
    %c0_2 = arith.constant 0 : index
    %2 = vector.load %arg2[%c0_1, %c0_2] : memref<16x96xbf16, #tpu.memory_space<vmem>>, vector<16x96xbf16>
    %cst = arith.constant dense<0.000000e+00> : vector<256x96xf32>
    %3 = tpu.matmul %1, %2, %cst {dimension_numbers = #tpu.dot_dimension_numbers<[1], [0], [0], [1], [0, 0, 1, 1], [], []>} : vector<256x16xbf16>, vector<16x96xbf16>, vector<256x96xf32> -> vector<256x96xf32>
    %4 = arith.truncf %3 : vector<256x96xf32> to vector<256x96xbf16>
    %c0_3 = arith.constant 0 : index
    %c0_4 = arith.constant 0 : index
    %5 = vector.load %arg3[%c0_3, %c0_4] : memref<256x96xbf16, #tpu.memory_space<vmem>>, vector<256x96xbf16>
    tpu.vector_store %arg3[%c0_3, %c0_4], %4 {strides = array<i32>} : memref<256x96xbf16, #tpu.memory_space<vmem>>, vector<256x96xbf16>,
    return
  }
  func.func @transform_0(%arg0: i32) -> (i32, i32) {
    %c0_i32 = arith.constant 0 : i32
    %c0_i32_0 = arith.constant 0 : i32
    return %arg0, %c0_i32 : i32, i32
  }
  func.func @transform_1(%arg0: i32) -> (i32, i32) {
    %c0_i32 = arith.constant 0 : i32
    %c0_i32_0 = arith.constant 0 : i32
    %c0_i32_1 = arith.constant 0 : i32
    return %c0_i32, %c0_i32_0 : i32, i32
  }
  func.func @transform_2(%arg0: i32) -> (i32, i32) {
    %c0_i32 = arith.constant 0 : i32
    %c0_i32_0 = arith.constant 0 : i32
    return %arg0, %c0_i32 : i32, i32
  }
}

</mosaic_0001>

<llo_original>
// kernel: tpu_custom_call.1
$region0: #{tpu_custom_call.1}
  #allocation0 [shape = 'u32[]', space=smem, size = 0x4, offset = 0x4, fixed_abs, tag = 'smem constant byte address 0x4 - core index']
  #allocation1 [shape = 'u32[144,128]{1,0:T(1,128)}', space=vmem, size = 0x12000, scoped, tag = 'internal scratch']
  %s0 = inlined_call_operand.vmem [shape: f32[256,16], index: 0, kind: input, shape index: {}]
  %s1 = inlined_call_operand.vmem [shape: bf16[16,96], index: 1, kind: input, shape index: {}]
  %s2 = inlined_call_operand.vmem [shape: bf16[256,96], index: 2, kind: output, shape index: {}]
  %s3 = sld [smem:[#allocation0]]
  $region18: #{tpu_custom_call.1} parent=0
    _
  %s5 = ssub.s32 1, %s3
  %s6 = scalar_select 0, %s5, %s3
  // Predicated region
  $region2: #{tpu_custom_call.1} parent=0 // pred_check
    _
  $region3: #{tpu_custom_call.1} parent=0 // pred_check_branch
    %8 = sbr.rel (0) target = $region5
  $region4: #{tpu_custom_call.1} parent=0 // pred_region
    _
  $region5: #{tpu_custom_call.1} parent=0 // pred_fallthru
    _
  // Predicated region
  $region6: #{tpu_custom_call.1} parent=0 // pred_check
    _
  $region7: #{tpu_custom_call.1} parent=0 // pred_check_branch
    %10 = sbr.rel (0) target = $region9
  $region8: #{tpu_custom_call.1} parent=0 // pred_region
    _
  $region9: #{tpu_custom_call.1} parent=0 // pred_fallthru
    _
  %v12 = vld [vmem:[%s0] sm:$0xff]
  %v13 = vld [vmem:[%s0 + $0x8] sm:$0xff]
  %v14 = vld [vmem:[%s0 + $0x10] sm:$0xff]
  %v15 = vld [vmem:[%s0 + $0x18] sm:$0xff]
  %v16 = vld [vmem:[%s0 + $0x20] sm:$0xff]
  %v17 = vld [vmem:[%s0 + $0x28] sm:$0xff]
  %v18 = vld [vmem:[%s0 + $0x30] sm:$0xff]
  %v19 = vld [vmem:[%s0 + $0x38] sm:$0xff]
  %v20 = vld [vmem:[%s0 + $0x40] sm:$0xff]
  %v21 = vld [vmem:[%s0 + $0x48] sm:$0xff]
  %v22 = vld [vmem:[%s0 + $0x50] sm:$0xff]
  %v23 = vld [vmem:[%s0 + $0x58] sm:$0xff]
  %v24 = vld [vmem:[%s0 + $0x60] sm:$0xff]
  %v25 = vld [vmem:[%s0 + $0x68] sm:$0xff]
  %v26 = vld [vmem:[%s0 + $0x70] sm:$0xff]
  %v27 = vld [vmem:[%s0 + $0x78] sm:$0xff]
  %v28 = vld [vmem:[%s0 + $0x80] sm:$0xff]
  %v29 = vld [vmem:[%s0 + $0x88] sm:$0xff]
  %v30 = vld [vmem:[%s0 + $0x90] sm:$0xff]
  %v31 = vld [vmem:[%s0 + $0x98] sm:$0xff]
  %v32 = vld [vmem:[%s0 + $0xa0] sm:$0xff]
  %v33 = vld [vmem:[%s0 + $0xa8] sm:$0xff]
  %v34 = vld [vmem:[%s0 + $0xb0] sm:$0xff]
  %v35 = vld [vmem:[%s0 + $0xb8] sm:$0xff]
  %v36 = vld [vmem:[%s0 + $0xc0] sm:$0xff]
  %v37 = vld [vmem:[%s0 + $0xc8] sm:$0xff]
  %v38 = vld [vmem:[%s0 + $0xd0] sm:$0xff]
  %v39 = vld [vmem:[%s0 + $0xd8] sm:$0xff]
  %v40 = vld [vmem:[%s0 + $0xe0] sm:$0xff]
  %v41 = vld [vmem:[%s0 + $0xe8] sm:$0xff]
  %v42 = vld [vmem:[%s0 + $0xf0] sm:$0xff]
  %v43 = vld [vmem:[%s0 + $0xf8] sm:$0xff]
  %v44 = vpack.c.bf16 %v13, %v12
  %v45 = vpack.c.bf16 %v15, %v14
  %v46 = vpack.c.bf16 %v17, %v16
  %v47 = vpack.c.bf16 %v19, %v18
  %v48 = vpack.c.bf16 %v21, %v20
  %v49 = vpack.c.bf16 %v23, %v22
  %v50 = vpack.c.bf16 %v25, %v24
  %v51 = vpack.c.bf16 %v27, %v26
  %v52 = vpack.c.bf16 %v29, %v28
  %v53 = vpack.c.bf16 %v31, %v30
  %v54 = vpack.c.bf16 %v33, %v32
  %v55 = vpack.c.bf16 %v35, %v34
  %v56 = vpack.c.bf16 %v37, %v36
  %v57 = vpack.c.bf16 %v39, %v38
  %v58 = vpack.c.bf16 %v41, %v40
  %v59 = vpack.c.bf16 %v43, %v42
  %v60 = vld [vmem:[%s1] sm:$0xf]
  %v61 = vld [vmem:[%s1 + $0x4] sm:$0xf]
  %v64 = vunpack.c.l.b16 %v60
  %v65 = vunpack.c.l.b16 %v61
  %v66 = vpack.c.b16 %v65, %v64
  %vm68 = vcmask 130048
  %v70 = vsel %vm68, %v44, 0
  %v73 = vsel %vm68, %v45, 0
  %v76 = vsel %vm68, %v46, 0
  %v79 = vsel %vm68, %v47, 0
  %v82 = vsel %vm68, %v48, 0
  %v85 = vsel %vm68, %v49, 0
  %v88 = vsel %vm68, %v50, 0
  %v91 = vsel %vm68, %v51, 0
  %v94 = vsel %vm68, %v52, 0
  %v97 = vsel %vm68, %v53, 0
  %v100 = vsel %vm68, %v54, 0
  %v103 = vsel %vm68, %v55, 0
  %v106 = vsel %vm68, %v56, 0
  %v109 = vsel %vm68, %v57, 0
  %v112 = vsel %vm68, %v58, 0
  %v115 = vsel %vm68, %v59, 0
  %117 = vmatprep.subr.bf16.mxu0 0
  %118 = vmatpush1.bf16.msra.mxu0 %v66
  %119 = vmatprep.subr.bf16.mxu0 0
  %120 = vmatpush1.bf16.msra.mxu0 0
  %121 = vmatprep.subr.bf16.mxu0 0
  %122 = vmatpush1.bf16.msra.mxu0 0
  %123 = vmatprep.subr.bf16.mxu0 0
  %124 = vmatpush1.bf16.msra.mxu0 0
  %125 = vmatprep.subr.bf16.mxu0 0
  %126 = vmatpush1.bf16.msra.mxu0 0
  %127 = vmatprep.subr.bf16.mxu0 0
  %128 = vmatpush1.bf16.msra.mxu0 0
  %129 = vmatprep.subr.bf16.mxu0 0
  %130 = vmatpush1.bf16.msra.mxu0 0
  %131 = vmatprep.subr.bf16.mxu0 0
  %132 = vmatpush1.bf16.msra.mxu0 0
  %133 = vmatprep.subr.bf16.mxu0 0
  %134 = vmatpush1.bf16.msra.mxu0 0
  %135 = vmatprep.subr.bf16.mxu0 0
  %136 = vmatpush1.bf16.msra.mxu0 0
  %137 = vmatprep.subr.bf16.mxu0 0
  %138 = vmatpush1.bf16.msra.mxu0 0
  %139 = vmatprep.subr.bf16.mxu0 0
  %140 = vmatpush1.bf16.msra.mxu0 0
  %141 = vmatprep.subr.bf16.mxu0 0
  %142 = vmatpush1.bf16.msra.mxu0 0
  %143 = vmatprep.subr.bf16.mxu0 0
  %144 = vmatpush1.bf16.msra.mxu0 0
  %145 = vmatprep.subr.bf16.mxu0 0
  %146 = vmatpush1.bf16.msra.mxu0 0
  %147 = vmatprep.subr.bf16.mxu0 0
  %148 = vmatpush1.bf16.msra.mxu0 0
  %149 = vmatprep.mubr.bf16.mxu0 0
  %150 = vmatmul.mubr.bf16.gmra.mrb[0].mxu0 %v70
  %v151 = vpop.f32.mrb[0].mxu0
  %v152 = vadd.f32 0.0, %v151
  %v153 = vpop.f32.mrb[0].mxu0
  %v154 = vpop.f32.mrb[0].mxu0
  %v155 = vadd.f32 0.0, %v154
  %v156 = vpop.f32.mrb[0].mxu0
  %157 = vmatprep.mubr.bf16.mxu0 0
  %158 = vmatmul.mubr.bf16.gmra.mrb[0].mxu0 %v73
  %v159 = vpop.f32.mrb[0].mxu0
  %v160 = vadd.f32 0.0, %v159
  %v161 = vpop.f32.mrb[0].mxu0
  %v162 = vpop.f32.mrb[0].mxu0
  %v163 = vadd.f32 0.0, %v162
  %v164 = vpop.f32.mrb[0].mxu0
  %165 = vmatprep.mubr.bf16.mxu0 0
  %166 = vmatmul.mubr.bf16.gmra.mrb[0].mxu0 %v76
  %v167 = vpop.f32.mrb[0].mxu0
  %v168 = vadd.f32 0.0, %v167
  %v169 = vpop.f32.mrb[0].mxu0
  %v170 = vpop.f32.mrb[0].mxu0
  %v171 = vadd.f32 0.0, %v170
  %v172 = vpop.f32.mrb[0].mxu0
  %173 = vmatprep.mubr.bf16.mxu0 0
  %174 = vmatmul.mubr.bf16.gmra.mrb[0].mxu0 %v79
  %v175 = vpop.f32.mrb[0].mxu0
  %v176 = vadd.f32 0.0, %v175
  %v177 = vpop.f32.mrb[0].mxu0
  %v178 = vpop.f32.mrb[0].mxu0
  %v179 = vadd.f32 0.0, %v178
  %v180 = vpop.f32.mrb[0].mxu0
  %181 = vmatprep.mubr.bf16.mxu0 0
  %182 = vmatmul.mubr.bf16.gmra.mrb[0].mxu0 %v82
  %v183 = vpop.f32.mrb[0].mxu0
  %v184 = vadd.f32 0.0, %v183
  %v185 = vpop.f32.mrb[0].mxu0
  %v186 = vpop.f32.mrb[0].mxu0
  %v187 = vadd.f32 0.0, %v186
  %v188 = vpop.f32.mrb[0].mxu0
  %189 = vmatprep.mubr.bf16.mxu0 0
  %190 = vmatmul.mubr.bf16.gmra.mrb[0].mxu0 %v85
  %v191 = vpop.f32.mrb[0].mxu0
  %v192 = vadd.f32 0.0, %v191
  %v193 = vpop.f32.mrb[0].mxu0
  %v194 = vpop.f32.mrb[0].mxu0
  %v195 = vadd.f32 0.0, %v194
  %v196 = vpop.f32.mrb[0].mxu0
  %197 = vmatprep.mubr.bf16.mxu0 0
  %198 = vmatmul.mubr.bf16.gmra.mrb[0].mxu0 %v88
  %v199 = vpop.f32.mrb[0].mxu0
  %v200 = vadd.f32 0.0, %v199
  %v201 = vpop.f32.mrb[0].mxu0
  %v202 = vpop.f32.mrb[0].mxu0
  %v203 = vadd.f32 0.0, %v202
  %v204 = vpop.f32.mrb[0].mxu0
  %205 = vmatprep.mubr.bf16.mxu0 0
  %206 = vmatmul.mubr.bf16.gmra.mrb[0].mxu0 %v91
  %v207 = vpop.f32.mrb[0].mxu0
  %v208 = vadd.f32 0.0, %v207
  %v209 = vpop.f32.mrb[0].mxu0
  %v210 = vpop.f32.mrb[0].mxu0
  %v211 = vadd.f32 0.0, %v210
  %v212 = vpop.f32.mrb[0].mxu0
  %213 = vmatprep.mubr.bf16.mxu0 0
  %214 = vmatmul.mubr.bf16.gmra.mrb[0].mxu0 %v94
  %v215 = vpop.f32.mrb[0].mxu0
  %v216 = vadd.f32 0.0, %v215
  %v217 = vpop.f32.mrb[0].mxu0
  %v218 = vpop.f32.mrb[0].mxu0
  %v219 = vadd.f32 0.0, %v218
  %v220 = vpop.f32.mrb[0].mxu0
  %221 = vmatprep.mubr.bf16.mxu0 0
  %222 = vmatmul.mubr.bf16.gmra.mrb[0].mxu0 %v97
  %v223 = vpop.f32.mrb[0].mxu0
  %v224 = vadd.f32 0.0, %v223
  %v225 = vpop.f32.mrb[0].mxu0
  %v226 = vpop.f32.mrb[0].mxu0
  %v227 = vadd.f32 0.0, %v226
  %v228 = vpop.f32.mrb[0].mxu0
  %229 = vmatprep.mubr.bf16.mxu0 0
  %230 = vmatmul.mubr.bf16.gmra.mrb[0].mxu0 %v100
  %v231 = vpop.f32.mrb[0].mxu0
  %v232 = vadd.f32 0.0, %v231
  %v233 = vpop.f32.mrb[0].mxu0
  %v234 = vpop.f32.mrb[0].mxu0
  %v235 = vadd.f32 0.0, %v234
  %v236 = vpop.f32.mrb[0].mxu0
  %237 = vmatprep.mubr.bf16.mxu0 0
  %238 = vmatmul.mubr.bf16.gmra.mrb[0].mxu0 %v103
  %v239 = vpop.f32.mrb[0].mxu0
  %v240 = vadd.f32 0.0, %v239
  %v241 = vpop.f32.mrb[0].mxu0
  %v242 = vpop.f32.mrb[0].mxu0
  %v243 = vadd.f32 0.0, %v242
  %v244 = vpop.f32.mrb[0].mxu0
  %245 = vmatprep.mubr.bf16.mxu0 0
  %246 = vmatmul.mubr.bf16.gmra.mrb[0].mxu0 %v106
  %v247 = vpop.f32.mrb[0].mxu0
  %v248 = vadd.f32 0.0, %v247
  %v249 = vpop.f32.mrb[0].mxu0
  %v250 = vpop.f32.mrb[0].mxu0
  %v251 = vadd.f32 0.0, %v250
  %v252 = vpop.f32.mrb[0].mxu0
  %253 = vmatprep.mubr.bf16.mxu0 0
  %254 = vmatmul.mubr.bf16.gmra.mrb[0].mxu0 %v109
  %v255 = vpop.f32.mrb[0].mxu0
  %v256 = vadd.f32 0.0, %v255
  %v257 = vpop.f32.mrb[0].mxu0
  %v258 = vpop.f32.mrb[0].mxu0
  %v259 = vadd.f32 0.0, %v258
  %v260 = vpop.f32.mrb[0].mxu0
  %261 = vmatprep.mubr.bf16.mxu0 0
  %262 = vmatmul.mubr.bf16.gmra.mrb[0].mxu0 %v112
  %v263 = vpop.f32.mrb[0].mxu0
  %v264 = vadd.f32 0.0, %v263
  %v265 = vpop.f32.mrb[0].mxu0
  %v266 = vpop.f32.mrb[0].mxu0
  %v267 = vadd.f32 0.0, %v266
  %v268 = vpop.f32.mrb[0].mxu0
  %269 = vmatprep.mubr.bf16.mxu0 0
  %270 = vmatmul.mubr.bf16.gmra.mrb[0].mxu0 %v115
  %v271 = vpop.f32.mrb[0].mxu0
  %v272 = vadd.f32 0.0, %v271
  %v273 = vpop.f32.mrb[0].mxu0
  %v274 = vpop.f32.mrb[0].mxu0
  %v275 = vadd.f32 0.0, %v274
  %v276 = vpop.f32.mrb[0].mxu0
  %277 = vdwg.mxu0
  %v278 = vpack.c.bf16 %v155, %v152
  %v279 = vpack.c.bf16 %v163, %v160
  %v280 = vpack.c.bf16 %v171, %v168
  %v281 = vpack.c.bf16 %v179, %v176
  %v282 = vpack.c.bf16 %v187, %v184
  %v283 = vpack.c.bf16 %v195, %v192
  %v284 = vpack.c.bf16 %v203, %v200
  %v285 = vpack.c.bf16 %v211, %v208
  %v286 = vpack.c.bf16 %v219, %v216
  %v287 = vpack.c.bf16 %v227, %v224
  %v288 = vpack.c.bf16 %v235, %v232
  %v289 = vpack.c.bf16 %v243, %v240
  %v290 = vpack.c.bf16 %v251, %v248
  %v291 = vpack.c.bf16 %v259, %v256
  %v292 = vpack.c.bf16 %v267, %v264
  %v293 = vpack.c.bf16 %v275, %v272
  %v310 = vunpack.c.l.b16 %v278
  %v311 = vunpack.c.h.b16 %v278
  %v312 = vunpack.c.l.b16 %v279
  %v313 = vunpack.c.h.b16 %v279
  %v314 = vunpack.c.l.b16 %v280
  %v315 = vunpack.c.h.b16 %v280
  %v316 = vunpack.c.l.b16 %v281
  %v317 = vunpack.c.h.b16 %v281
  %v318 = vunpack.c.l.b16 %v282
  %v319 = vunpack.c.h.b16 %v282
  %v320 = vunpack.c.l.b16 %v283
  %v321 = vunpack.c.h.b16 %v283
  %v322 = vunpack.c.l.b16 %v284
  %v323 = vunpack.c.h.b16 %v284
  %v324 = vunpack.c.l.b16 %v285
  %v325 = vunpack.c.h.b16 %v285
  %v326 = vunpack.c.l.b16 %v286
  %v327 = vunpack.c.h.b16 %v286
  %v328 = vunpack.c.l.b16 %v287
  %v329 = vunpack.c.h.b16 %v287
  %v330 = vunpack.c.l.b16 %v288
  %v331 = vunpack.c.h.b16 %v288
  %v332 = vunpack.c.l.b16 %v289
  %v333 = vunpack.c.h.b16 %v289
  %v334 = vunpack.c.l.b16 %v290
  %v335 = vunpack.c.h.b16 %v290
  %v336 = vunpack.c.l.b16 %v291
  %v337 = vunpack.c.h.b16 %v291
  %v338 = vunpack.c.l.b16 %v292
  %v339 = vunpack.c.h.b16 %v292
  %v340 = vunpack.c.l.b16 %v293
  %v341 = vunpack.c.h.b16 %v293
  %v342 = vpack.c.b16 %v310, %v310
  %v343 = vpack.c.b16 %v311, %v311
  %v344 = vpack.c.b16 %v312, %v312
  %v345 = vpack.c.b16 %v313, %v313
  %v346 = vpack.c.b16 %v314, %v314
  %v347 = vpack.c.b16 %v315, %v315
  %v348 = vpack.c.b16 %v316, %v316
  %v349 = vpack.c.b16 %v317, %v317
  %v350 = vpack.c.b16 %v318, %v318
  %v351 = vpack.c.b16 %v319, %v319
  %v352 = vpack.c.b16 %v320, %v320
  %v353 = vpack.c.b16 %v321, %v321
  %v354 = vpack.c.b16 %v322, %v322
  %v355 = vpack.c.b16 %v323, %v323
  %v356 = vpack.c.b16 %v324, %v324
  %v357 = vpack.c.b16 %v325, %v325
  %v358 = vpack.c.b16 %v326, %v326
  %v359 = vpack.c.b16 %v327, %v327
  %v360 = vpack.c.b16 %v328, %v328
  %v361 = vpack.c.b16 %v329, %v329
  %v362 = vpack.c.b16 %v330, %v330
  %v363 = vpack.c.b16 %v331, %v331
  %v364 = vpack.c.b16 %v332, %v332
  %v365 = vpack.c.b16 %v333, %v333
  %v366 = vpack.c.b16 %v334, %v334
  %v367 = vpack.c.b16 %v335, %v335
  %v368 = vpack.c.b16 %v336, %v336
  %v369 = vpack.c.b16 %v337, %v337
  %v370 = vpack.c.b16 %v338, %v338
  %v371 = vpack.c.b16 %v339, %v339
  %v372 = vpack.c.b16 %v340, %v340
  %v373 = vpack.c.b16 %v341, %v341
  %vm406 = vcmask 781312
  %407 = vst.msk [vmem:[%s2] sm:$0xf] %vm406, %v342
  %408 = vst.msk [vmem:[%s2 + $0x4] sm:$0xf] %vm406, %v343
  %409 = vst.msk [vmem:[%s2 + $0x8] sm:$0xf] %vm406, %v344
  %410 = vst.msk [vmem:[%s2 + $0xc] sm:$0xf] %vm406, %v345
  %411 = vst.msk [vmem:[%s2 + $0x10] sm:$0xf] %vm406, %v346
  %412 = vst.msk [vmem:[%s2 + $0x14] sm:$0xf] %vm406, %v347
  %413 = vst.msk [vmem:[%s2 + $0x18] sm:$0xf] %vm406, %v348
  %414 = vst.msk [vmem:[%s2 + $0x1c] sm:$0xf] %vm406, %v349
  %415 = vst.msk [vmem:[%s2 + $0x20] sm:$0xf] %vm406, %v350
  %416 = vst.msk [vmem:[%s2 + $0x24] sm:$0xf] %vm406, %v351
  %417 = vst.msk [vmem:[%s2 + $0x28] sm:$0xf] %vm406, %v352
  %418 = vst.msk [vmem:[%s2 + $0x2c] sm:$0xf] %vm406, %v353
  %419 = vst.msk [vmem:[%s2 + $0x30] sm:$0xf] %vm406, %v354
  %420 = vst.msk [vmem:[%s2 + $0x34] sm:$0xf] %vm406, %v355
  %421 = vst.msk [vmem:[%s2 + $0x38] sm:$0xf] %vm406, %v356
  %422 = vst.msk [vmem:[%s2 + $0x3c] sm:$0xf] %vm406, %v357
  %423 = vst.msk [vmem:[%s2 + $0x40] sm:$0xf] %vm406, %v358
  %424 = vst.msk [vmem:[%s2 + $0x44] sm:$0xf] %vm406, %v359
  %425 = vst.msk [vmem:[%s2 + $0x48] sm:$0xf] %vm406, %v360
  %426 = vst.msk [vmem:[%s2 + $0x4c] sm:$0xf] %vm406, %v361
  %427 = vst.msk [vmem:[%s2 + $0x50] sm:$0xf] %vm406, %v362
  %428 = vst.msk [vmem:[%s2 + $0x54] sm:$0xf] %vm406, %v363
  %429 = vst.msk [vmem:[%s2 + $0x58] sm:$0xf] %vm406, %v364
  %430 = vst.msk [vmem:[%s2 + $0x5c] sm:$0xf] %vm406, %v365
  %431 = vst.msk [vmem:[%s2 + $0x60] sm:$0xf] %vm406, %v366
  %432 = vst.msk [vmem:[%s2 + $0x64] sm:$0xf] %vm406, %v367
  %433 = vst.msk [vmem:[%s2 + $0x68] sm:$0xf] %vm406, %v368
  %434 = vst.msk [vmem:[%s2 + $0x6c] sm:$0xf] %vm406, %v369
  %435 = vst.msk [vmem:[%s2 + $0x70] sm:$0xf] %vm406, %v370
  %436 = vst.msk [vmem:[%s2 + $0x74] sm:$0xf] %vm406, %v371
  %437 = vst.msk [vmem:[%s2 + $0x78] sm:$0xf] %vm406, %v372
  %438 = vst.msk [vmem:[%s2 + $0x7c] sm:$0xf] %vm406, %v373
  // Predicated region
  $region10: #{tpu_custom_call.1} parent=0 // pred_check
    _
  $region11: #{tpu_custom_call.1} parent=0 // pred_check_branch
    %440 = sbr.rel (0) target = $region13
  $region12: #{tpu_custom_call.1} parent=0 // pred_region
    _
  $region13: #{tpu_custom_call.1} parent=0 // pred_fallthru
    _
  // Predicated region
  $region14: #{tpu_custom_call.1} parent=0 // pred_check
    _
  $region15: #{tpu_custom_call.1} parent=0 // pred_check_branch
    %442 = sbr.rel (0) target = $region17
  $region16: #{tpu_custom_call.1} parent=0 // pred_region
    _
  $region17: #{tpu_custom_call.1} parent=0 // pred_fallthru
    _

</llo_original>
